<compile_context>
chip_gen: v6e
topology: v6e:2x2x1
jax: 0.10.0
libtpu: 0.0.40
codegen_flags: <defaults>
</compile_context>

<pallas_src>
import jax
import jax.numpy as jnp
from jax.experimental import pallas as pl
from jax.experimental.pallas import tpu as pltpu


CHUNK = 128  # inner chunk width along the lane (spatial) axis


def _round_up(x, m):
    return (x + m - 1) // m * m


def enet_v2_forward(x_nchw, w1, b1, w2, b2, *, hw_tile=1024, n_split=None):
    """x_nchw: (B, C, H, W) float32.  Returns (B, out_dim) float32.

    w1/b1: synthetic pointwise-stem weight (C, F) / bias (F,)
    w2/b2: myfc Linear weight (F, out_dim) / bias (out_dim,)
    """
    B, C, H, W = x_nchw.shape
    F = w1.shape[1]
    O = w2.shape[1]
    HW = H * W

    if n_split is None:
        # Keep both v7x TensorCores busy even at B == 1 by splitting HW.
        n_split = 2 if B == 1 else 1

    C_aug = C + 1                      # +1 constant-one "bias channel"
    C_pad = _round_up(C_aug, 16)       # bf16 sublane packing is (16, 128)
    F_pad = _round_up(F, 128)
    O_pad = _round_up(O, 128)

    hw_tile = _round_up(max(CHUNK, min(hw_tile, HW)), CHUNK)
    HW_pad = _round_up(HW, n_split * hw_tile)
    n_hw = HW_pad // (n_split * hw_tile)
    n_chunks = hw_tile // CHUNK
    inv_hw = 1.0 / HW

    # ---- host-side data prep (no transpose; NCHW is kept as-is) -------------
    # x: (B, C, HW) -> append a ones channel (carries the stem bias through the
    # matmul) -> zero-pad channels to C_pad and spatial to HW_pad -> flatten to
    # a 2-D (B*C_pad, HW_pad) bf16 slab with spatial on the lane axis.
    # Zero spatial padding zeroes the bias channel too, so padded columns
    # contribute exactly 0 after ReLU -- no mask / correction needed.
    x3 = x_nchw.reshape(B, C, HW).astype(jnp.float32)
    x3 = jnp.concatenate([x3, jnp.ones((B, 1, HW), jnp.float32)], axis=1)
    x3 = jnp.pad(x3, ((0, 0), (0, C_pad - C_aug), (0, HW_pad - HW)))
    x2d = x3.reshape(B * C_pad, HW_pad).astype(jnp.bfloat16)

    # w1^T augmented with the bias column (bias rides the ones channel).
    w1t = jnp.zeros((F_pad, C_pad), jnp.float32)
    w1t = w1t.at[:F, :C].set(w1.T)
    w1t = w1t.at[:F, C].set(b1)
    w1t = w1t.astype(jnp.bfloat16)

    w2p = jnp.pad(w2, ((0, F_pad - F), (0, O_pad - O))).astype(jnp.bfloat16)
    b2p = jnp.pad(b2, (0, O_pad - O)).reshape(1, O_pad).astype(jnp.float32)

    # ---- kernel 1: pointwise stem + ReLU + spatial-sum pooling ---------------
    def stem_pool_kernel(x_ref, w1_ref, out_ref):
        h = pl.program_id(2)

        @pl.when(h == 0)
        def _init():
            out_ref[...] = jnp.zeros_like(out_ref)

        w1m = w1_ref[...]                                   # (F_pad, C_pad) bf16
        psum = jnp.zeros((F_pad, 1), jnp.float32)
        # Unrolled static chunk loop: live f32 intermediate stays (F_pad, 128).
        for c in range(n_chunks):
            xc = x_ref[:, c * CHUNK:(c + 1) * CHUNK]        # (C_pad, CHUNK) bf16
            a = jnp.dot(w1m, xc,
                        preferred_element_type=jnp.float32)  # (F_pad, CHUNK) f32
            a = jnp.maximum(a, 0.0)                         # bias folded into dot
            psum = psum + jnp.sum(a, axis=1, keepdims=True)  # XLU lane reduce
        out_ref[...] += psum[None]                          # resident accumulator

    flops1 = 2 * B * HW_pad * C_pad * F_pad
    bytes1 = x2d.size * 2 + w1t.size * 2 + B * n_split * F_pad * 4

    sums = pl.pallas_call(
        stem_pool_kernel,
        out_shape=jax.ShapeDtypeStruct((B * n_split, F_pad, 1), jnp.float32),
        grid=(B, n_split, n_hw),
        in_specs=[
            # streaming x: one lane-dense (C_pad, hw_tile) block per grid step
            pl.BlockSpec((C_pad, hw_tile), lambda b, s, h: (b, s * n_hw + h)),
            # w1^T: tiny, resident every step
            pl.BlockSpec((F_pad, C_pad), lambda b, s, h: (0, 0)),
        ],
        # output block constant across the HW (reduction) axis -> accumulator;
        # one independent partial-sum block per (batch, split).
        out_specs=pl.BlockSpec((1, F_pad, 1),
                               lambda b, s, h: (b * n_split + s, 0, 0)),
        compiler_params=pltpu.CompilerParams(
            dimension_semantics=("parallel", "parallel", "arbitrary"),
            vmem_limit_bytes=32 * 1024 * 1024,
        ),
        cost_estimate=pl.CostEstimate(
            flops=flops1, transcendentals=0, bytes_accessed=bytes1),
    )(x2d, w1t)

    # ---- tiny epilogue: combine split partials (per-core outputs) ------------
    pooled = sums.reshape(B, n_split, F_pad).sum(axis=1)    # (B, F_pad) f32

    # ---- kernel 2: batched global-avg-pool finalize + myfc Linear ------------
    def myfc_kernel(feat_ref, w2_ref, b2_ref, out_ref):
        feats = (feat_ref[...] * inv_hw).astype(jnp.bfloat16)   # (B, F_pad)
        out = jnp.dot(feats, w2_ref[...],
                      preferred_element_type=jnp.float32)       # (B, O_pad)
        out_ref[...] = out + b2_ref[...]

    flops2 = 2 * B * F_pad * O_pad
    bytes2 = pooled.size * 4 + w2p.size * 2 + b2p.size * 4 + B * O_pad * 4

    out = pl.pallas_call(
        myfc_kernel,
        out_shape=jax.ShapeDtypeStruct((B, O_pad), jnp.float32),
        grid=(1,),
        in_specs=[
            pl.BlockSpec((B, F_pad), lambda i: (0, 0)),
            pl.BlockSpec((F_pad, O_pad), lambda i: (0, 0)),
            pl.BlockSpec((1, O_pad), lambda i: (0, 0)),
        ],
        out_specs=pl.BlockSpec((B, O_pad), lambda i: (0, 0)),
        compiler_params=pltpu.CompilerParams(
            dimension_semantics=("arbitrary",),
            vmem_limit_bytes=32 * 1024 * 1024,
        ),
        cost_estimate=pl.CostEstimate(
            flops=flops2, transcendentals=0, bytes_accessed=bytes2),
    )(pooled, w2p, b2p)

    return out[:, :O]


def _reference(x_nchw, w1, b1, w2, b2):
    """Pure-JAX reference with the same bf16-operand / f32-accumulate recipe."""
    B, C, H, W = x_nchw.shape
    x = jnp.transpose(x_nchw, (0, 2, 3, 1)).reshape(B, H * W, C)
    h = jnp.einsum("bpc,cf->bpf", x.astype(jnp.bfloat16),
                   w1.astype(jnp.bfloat16),
                   preferred_element_type=jnp.float32)
    h = jnp.maximum(h + b1.astype(jnp.float32), 0.0)
    feats = jnp.mean(h, axis=1)
    out = jnp.dot(feats.astype(jnp.bfloat16), w2.astype(jnp.bfloat16),
                  preferred_element_type=jnp.float32)
    return out + b2.astype(jnp.float32)


if __name__ == "__main__":
    # Small shapes consistent with the forward pass: image batch (NCHW),
    # backbone feature dim in_ch, classifier out_dim.
    B, C, H, W = 2, 4, 16, 16
    IN_CH = 32        # self.enet.classifier.in_features (synthetic)
    OUT_DIM = 8       # out_dim of myfc

    key = jax.random.PRNGKey(0)
    kx, kx2, k1, kb1, k2, kb2 = jax.random.split(key, 6)

    x = jax.random.normal(kx, (B, C, H, W), dtype=jnp.float32)
    w1 = jax.random.normal(k1, (C, IN_CH), dtype=jnp.float32) * 0.1
    b1 = jax.random.normal(kb1, (IN_CH,), dtype=jnp.float32) * 0.01
    w2 = jax.random.normal(k2, (IN_CH, OUT_DIM), dtype=jnp.float32) * 0.1
    b2 = jax.random.normal(kb2, (OUT_DIM,), dtype=jnp.float32) * 0.01

    # Case 1: hw_tile=128 -> 2 HW-reduction steps (exercises the resident
    # output-block accumulator path).
    out = enet_v2_forward(x, w1, b1, w2, b2, hw_tile=128)
    out = jax.block_until_ready(out)
    ref = _reference(x, w1, b1, w2, b2)
    assert out.shape == (B, OUT_DIM)
    assert jnp.allclose(out, ref, atol=1e-3, rtol=1e-3)

    # Case 2: ragged spatial size (zero-padded columns via the bias-channel
    # trick), 2-chunk inner loop, and a forced HW split across a parallel
    # grid axis (the v7x B==1-style path).
    x2 = jax.random.normal(kx2, (B, C, 12, 12), dtype=jnp.float32)
    out2 = enet_v2_forward(x2, w1, b1, w2, b2, hw_tile=256, n_split=2)
    out2 = jax.block_until_ready(out2)
    ref2 = _reference(x2, w1, b1, w2, b2)
    assert out2.shape == (B, OUT_DIM)
    assert jnp.allclose(out2, ref2, atol=1e-3, rtol=1e-3)

    print("KERNEL_OK")
</pallas_src>

<mosaic_0001>
module attributes {stable_mosaic.version = 11 : i64} {
  func.func @stem_pool_kernel(%arg0: i32, %arg1: i32, %arg2: i32, %arg3: memref<16x128xbf16, #tpu.memory_space<vmem>>, %arg4: memref<128x16xbf16, #tpu.memory_space<vmem>>, %arg5: memref<1x128x1xf32, #tpu.memory_space<vmem>>) attributes {dimension_semantics = [#tpu.dimension_semantics<parallel>, #tpu.dimension_semantics<parallel>, #tpu.dimension_semantics<arbitrary>], iteration_bounds = array<i64: 2, 1, 2>, scalar_prefetch = 0 : i64, scratch_operands = 0 : i64, tpu.core_type = #tpu.core_type<tc>, window_params = [{transform_indices = @transform_0, window_bounds = array<i64: 16, 128>}, {pipeline_mode = #tpu.pipeline_mode<synchronous>, transform_indices = @transform_1, window_bounds = array<i64: 128, 16>}, {transform_indices = @transform_2, window_bounds = array<i64: 1, 128, 1>}]} {
    %c0_i32 = arith.constant 0 : i32
    %0 = arith.cmpi eq, %arg2, %c0_i32 : i32
    %1 = arith.extui %0 : i1 to i32
    %c0_i32_0 = arith.constant 0 : i32
    %2 = arith.cmpi ne, %1, %c0_i32_0 : i32
    scf.if %2 {
      %cst_13 = arith.constant 0.000000e+00 : f32
      %16 = vector.broadcast %cst_13 : f32 to vector<1x128x1xf32>
      %c0_14 = arith.constant 0 : index
      %c0_15 = arith.constant 0 : index
      %c0_16 = arith.constant 0 : index
      %17 = vector.load %arg5[%c0_14, %c0_15, %c0_16] : memref<1x128x1xf32, #tpu.memory_space<vmem>>, vector<1x128x1xf32>
      tpu.vector_store %arg5[%c0_14, %c0_15, %c0_16], %16 {strides = array<i32>} : memref<1x128x1xf32, #tpu.memory_space<vmem>>, vector<1x128x1xf32>,
    } else {
    }
    %c0 = arith.constant 0 : index
    %c0_1 = arith.constant 0 : index
    %3 = vector.load %arg4[%c0, %c0_1] : memref<128x16xbf16, #tpu.memory_space<vmem>>, vector<128x16xbf16>
    %cst = arith.constant 0.000000e+00 : f32
    %4 = vector.broadcast %cst : f32 to vector<128x1xf32>
    %c0_2 = arith.constant 0 : index
    %c0_3 = arith.constant 0 : index
    %5 = vector.load %arg3[%c0_2, %c0_3] : memref<16x128xbf16, #tpu.memory_space<vmem>>, vector<16x128xbf16>
    %cst_4 = arith.constant dense<0.000000e+00> : vector<128x128xf32>
    %6 = tpu.matmul %3, %5, %cst_4 {dimension_numbers = #tpu.dot_dimension_numbers<[1], [0], [0], [1], [0, 0, 1, 1], [], []>} : vector<128x16xbf16>, vector<16x128xbf16>, vector<128x128xf32> -> vector<128x128xf32>
    %cst_5 = arith.constant 0.000000e+00 : f32
    %7 = vector.broadcast %cst_5 : f32 to vector<128x128xf32>
    %8 = arith.maximumf %6, %7 : vector<128x128xf32>
    %cst_6 = arith.constant dense<0.000000e+00> : vector<128xf32>
    %9 = vector.multi_reduction <add>, %8, %cst_6 [1] : vector<128x128xf32> to vector<128xf32>
    %10 = vector.shape_cast %9 : vector<128xf32> to vector<128x1xf32>
    %11 = arith.addf %4, %10 : vector<128x1xf32>
    %c0_7 = arith.constant 0 : index
    %c0_8 = arith.constant 0 : index
    %c0_9 = arith.constant 0 : index
    %12 = vector.load %arg5[%c0_7, %c0_8, %c0_9] : memref<1x128x1xf32, #tpu.memory_space<vmem>>, vector<1x128x1xf32>
    %13 = vector.shape_cast %11 : vector<128x1xf32> to vector<1x128x1xf32>
    %14 = arith.addf %12, %13 : vector<1x128x1xf32>
    %c0_10 = arith.constant 0 : index
    %c0_11 = arith.constant 0 : index
    %c0_12 = arith.constant 0 : index
    %15 = vector.load %arg5[%c0_10, %c0_11, %c0_12] : memref<1x128x1xf32, #tpu.memory_space<vmem>>, vector<1x128x1xf32>
    tpu.vector_store %arg5[%c0_10, %c0_11, %c0_12], %14 {strides = array<i32>} : memref<1x128x1xf32, #tpu.memory_space<vmem>>, vector<1x128x1xf32>,
    return
  }
  func.func @transform_0(%arg0: i32, %arg1: i32, %arg2: i32) -> (i32, i32) {
    %c2_i32 = arith.constant 2 : i32
    %0 = arith.muli %arg1, %c2_i32 : i32
    %1 = arith.addi %0, %arg2 : i32
    %c0_i32 = arith.constant 0 : i32
    return %arg0, %1 : i32, i32
  }
  func.func @transform_1(%arg0: i32, %arg1: i32, %arg2: i32) -> (i32, i32) {
    %c0_i32 = arith.constant 0 : i32
    %c0_i32_0 = arith.constant 0 : i32
    %c0_i32_1 = arith.constant 0 : i32
    return %c0_i32, %c0_i32_0 : i32, i32
  }
  func.func @transform_2(%arg0: i32, %arg1: i32, %arg2: i32) -> (i32, i32, i32) {
    %c1_i32 = arith.constant 1 : i32
    %0 = arith.muli %arg0, %c1_i32 : i32
    %1 = arith.addi %0, %arg1 : i32
    %c0_i32 = arith.constant 0 : i32
    %c0_i32_0 = arith.constant 0 : i32
    %c0_i32_1 = arith.constant 0 : i32
    return %1, %c0_i32, %c0_i32_0 : i32, i32, i32
  }
}

</mosaic_0001>

<llo_original>
// kernel: tpu_custom_call.1
$region0: #{tpu_custom_call.1}
  #allocation0 [shape = 'u32[]', space=smem, size = 0x4, offset = 0x4, fixed_abs, tag = 'smem constant byte address 0x4 - core index']
  #allocation1 [shape = 'u32[144,128]{1,0:T(1,128)}', space=vmem, size = 0x12000, scoped, tag = 'internal scratch']
  %s0 = inlined_call_operand.vmem [shape: bf16[32,256], index: 0, kind: input, shape index: {}]
  %s1 = inlined_call_operand.vmem [shape: bf16[128,16], index: 1, kind: input, shape index: {}]
  %s2 = inlined_call_operand.vmem [shape: f32[2,128,1], index: 2, kind: output, shape index: {}]
  %s3 = sld [smem:[#allocation0]]
  $region86: #{tpu_custom_call.1} parent=0
    _
  %s5 = ssub.s32 1, %s3
  %s6 = scalar_select 0, %s5, %s3
  $region1: #{tpu_custom_call.1} parent=0
    #allocation2 [shape = 'u8[8192]{0}', space=vmem, size = 0x2000, scoped, tag = 'input window, operand 0']
    loop: start=0, step=1, limit=6
    $region2: #{tpu_custom_call.1} parent=1 // loop_pre_header
      _
    $region3: #{tpu_custom_call.1} parent=1 // loop_header
      %s8 = sphi 0, %s12
      %p9 = scmp.ge.s32.totalorder %s8, 6
      %s15 = sphi 0, %s34
      %s16 = sphi 0, %s30
      %s17 = sphi 0, %s26
      %s18 = sphi 0, %s15
      %s19 = sphi 0, %s16
      %s20 = sphi 0, %s17
      %s21 = sphi 0, %s18
      %s22 = sphi 0, %s19
      %s23 = sphi 0, %s20
      %s43 = sphi 0, %s45
      %s46 = sphi 0, %s43
      %s47 = sphi 0, %s46
      %s63 = sphi 0, %s47
      %s67 = sphi 0, %s67
      %s69 = sphi 0, %s67
      %s70 = sphi 0, %s69
      %s84 = sphi 0, %s70
      %s92 = sphi 0, %s94
      %s95 = sphi 0, %s92
      %s96 = sphi 0, %s95
      %s112 = sphi 0, %s96
    $region4: #{tpu_custom_call.1} parent=1 // loop_header_branch
      %11 = sbr.rel (%p9) target = $region8
    $region5: #{tpu_custom_call.1} parent=1 // loop_body
      %s13 = ssub.s32 %s8, 1
      %s14 = ssub.s32 %s8, 2
      %s24 = sadd.s32 1, %s17
      %p25 = scmp.ge.s32.totalorder %s24, 2
      %s26 = scalar_select %p25, 0, %s24
      %s27 = sadd.s32 1, %s16
      %s28 = scalar_select %p25, %s27, %s16
      %p29 = scmp.ge.s32.totalorder %s28, 1
      %s30 = scalar_select %p29, 0, %s28
      %s31 = sadd.s32 1, %s15
      %s32 = scalar_select %p29, %s31, %s15
      %p33 = scmp.ge.s32.totalorder %s32, 2
      %s34 = scalar_select %p33, 0, %s32
      %s35 = smul.u32 %s16, 2
      %s36 = sadd.s32 %s35, %s17
      %s37 = smul.u32 %s30, 2
      %s38 = sadd.s32 %s37, %s26
      %s39 = ssub.s32 %s15, %s34
      %s40 = ssub.s32 %s36, %s38
      %s41 = sor.u32 %s39, %s40
      %p42 = scmp.eq.s32.totalorder %s41, 0
      %s44 = sadd.s32 %s43, 1
      %s45 = scalar_select %p42, %s43, %s44
      %p48 = pneg %p42
      %p49 = scmp.eq.s32.totalorder %s8, 3
      %p50 = por %p48, %p49
      %p51 = scmp.ne.s32.totalorder %s43, %s46
      %p52 = scmp.eq.s32.totalorder %s8, 0
      %p53 = por %p51, %p52
      %p54 = scmp.ne.s32.totalorder %s43, %s46
      %p55 = scmp.eq.s32.totalorder %s13, 3
      %p56 = por %p54, %p55
      %p57 = scmp.ne.s32.totalorder %s46, %s47
      %p58 = scmp.eq.s32.totalorder %s13, 0
      %p59 = por %p57, %p58
      %p60 = scmp.ne.s32.totalorder %s46, %s47
      %p61 = scmp.eq.s32.totalorder %s14, 3
      %p62 = por %p60, %p61
      %p64 = scmp.ne.s32.totalorder %s47, %s63
      %p65 = scmp.eq.s32.totalorder %s14, 0
      %p66 = por %p64, %p65
      %s68 = sadd.s32 %s67, 1
      %p71 = scmp.eq.s32.totalorder %s8, 3
      %p72 = scmp.ne.s32.totalorder %s67, %s69
      %p73 = scmp.eq.s32.totalorder %s8, 0
      %p74 = por %p72, %p73
      %p75 = scmp.ne.s32.totalorder %s67, %s69
      %p76 = scmp.eq.s32.totalorder %s13, 3
      %p77 = por %p75, %p76
      %p78 = scmp.ne.s32.totalorder %s69, %s70
      %p79 = scmp.eq.s32.totalorder %s13, 0
      %p80 = por %p78, %p79
      %p81 = scmp.ne.s32.totalorder %s69, %s70
      %p82 = scmp.eq.s32.totalorder %s14, 3
      %p83 = por %p81, %p82
      %p85 = scmp.ne.s32.totalorder %s70, %s84
      %p86 = scmp.eq.s32.totalorder %s14, 0
      %p87 = por %p85, %p86
      %s88 = sadd.s32 %s15, %s16
      %s89 = sadd.s32 %s34, %s30
      %s90 = ssub.s32 %s88, %s89
      %p91 = scmp.eq.s32.totalorder %s90, 0
      %s93 = sadd.s32 %s92, 1
      %s94 = scalar_select %p91, %s92, %s93
      %p97 = pneg %p91
      %p98 = scmp.eq.s32.totalorder %s8, 3
      %p99 = por %p97, %p98
      %p100 = scmp.ne.s32.totalorder %s92, %s95
      %p101 = scmp.eq.s32.totalorder %s8, 0
      %p102 = por %p100, %p101
      %p103 = scmp.ne.s32.totalorder %s92, %s95
      %p104 = scmp.eq.s32.totalorder %s13, 3
      %p105 = por %p103, %p104
      %p106 = scmp.ne.s32.totalorder %s95, %s96
      %p107 = scmp.eq.s32.totalorder %s13, 0
      %p108 = por %p106, %p107
      %p109 = scmp.ne.s32.totalorder %s95, %s96
      %p110 = scmp.eq.s32.totalorder %s14, 3
      %p111 = por %p109, %p110
      %p113 = scmp.ne.s32.totalorder %s96, %s112
      %p114 = scmp.eq.s32.totalorder %s14, 0
      %p115 = por %p113, %p114
      %p116 = scmp.le.s32.totalorder 1, %s8
      %p117 = scmp.lt.s32.totalorder %s8, 5
      %p118 = pnand %p116, %p117
      %p119 = pneg %p118
      // Predicated region
      $region9: #{tpu_custom_call.1} parent=5 // pred_check
        _
      $region10: #{tpu_custom_call.1} parent=5 // pred_check_branch
        %121 = sbr.rel (%p118) target = $region12
      $region11: #{tpu_custom_call.1} parent=5 // pred_region
        %s122 = ssub.s32 %s8, 1
        // Predicated region
        $region13: #{tpu_custom_call.1} parent=11 // pred_check
          %p123 = pneg %p80
        $region14: #{tpu_custom_call.1} parent=11 // pred_check_branch
          %125 = sbr.rel (%p123) target = $region16
        $region15: #{tpu_custom_call.1} parent=11 // pred_region
          _
        $region16: #{tpu_custom_call.1} parent=11 // pred_fallthru
          _
      $region12: #{tpu_custom_call.1} parent=5 // pred_fallthru
        _
      %p126 = scmp.lt.s32.totalorder %s8, 4
      // Predicated region
      $region17: #{tpu_custom_call.1} parent=5 // pred_check
        %p127 = pneg %p126
      $region18: #{tpu_custom_call.1} parent=5 // pred_check_branch
        %129 = sbr.rel (%p127) target = $region20
      $region19: #{tpu_custom_call.1} parent=5 // pred_region
        // Predicated region
        $region21: #{tpu_custom_call.1} parent=19 // pred_check
          %p130 = pneg %p53
        $region22: #{tpu_custom_call.1} parent=19 // pred_check_branch
          %132 = sbr.rel (%p130) target = $region24
        $region23: #{tpu_custom_call.1} parent=19 // pred_region
          %s133 = sand.u32 %s43, 1
          %s134 = sand.u32 %s43, 1
          %s135 = smul.addr %s134, 8
          %s136 = scalar_lea.vmem [#allocation2], %s135
          %s137 = smul.u32 %s16, 2
          %s138 = sadd.s32 %s137, %s17
          %s139 = smul.u32 2, %s15
          %s140 = smul.addr %s139, 2
          %s141 = sadd.s32 %s138, %s140
          %s142 = smul.addr %s141, 4
          %s143 = scalar_lea.vmem %s0, %s142
          // Predicated region
          $region25: #{tpu_custom_call.1} parent=23 // pred_check
            _
          $region26: #{tpu_custom_call.1} parent=23 // pred_check_branch
            %145 = sbr.rel (0) target = $region28
          $region27: #{tpu_custom_call.1} parent=23 // pred_region
            // Predicated region
            $region29: #{tpu_custom_call.1} parent=27 // pred_check
              _
            $region30: #{tpu_custom_call.1} parent=27 // pred_check_branch
              %147 = sbr.rel target = $region32
            $region31: #{tpu_custom_call.1} parent=27 // pred_region
              // Predicated region
              $region44: #{tpu_custom_call.1} parent=31 // pred_check
                _
              $region45: #{tpu_custom_call.1} parent=31 // pred_check_branch
                %165 = sbr.rel (0) target = $region47
              $region46: #{tpu_custom_call.1} parent=31 // pred_region
                loop: start=0, step=1, limit=1
                $region48: #{tpu_custom_call.1} parent=46 // loop_pre_header
                  _
                $region49: #{tpu_custom_call.1} parent=46 // loop_header
                  %s167 = sphi 0, %s171
                  %p168 = scmp.ge.s32.totalorder %s167, 1
                  %s172 = sphi %s143, %s143
                  %s173 = sphi %s136, %s136
                $region50: #{tpu_custom_call.1} parent=46 // loop_header_branch
                  %170 = sbr.rel (%p168) target = $region54
                $region51: #{tpu_custom_call.1} parent=46 // loop_body
                  _
                $region52: #{tpu_custom_call.1} parent=46 // loop_footer
                  %s171 = sadd.s32 1, %s167
                $region53: #{tpu_custom_call.1} parent=46 // loop_footer_branch
                  %166 = sbr.rel target = $region49
                $region54: #{tpu_custom_call.1} parent=46 // loop_exit
                  _
                %s175 = ssub.s32 16, 1
                loop: start=0, step=1, limit=1
                $region55: #{tpu_custom_call.1} parent=46 // loop_pre_header
                  _
                $region56: #{tpu_custom_call.1} parent=46 // loop_header
                  %s177 = sphi 0, %s181
                  %p178 = scmp.ge.s32.totalorder %s177, 1
                  %s182 = sphi %s143, %s143
                  %s183 = sphi %s136, %s136
                $region57: #{tpu_custom_call.1} parent=46 // loop_header_branch
                  %180 = sbr.rel (%p178) target = $region61
                $region58: #{tpu_custom_call.1} parent=46 // loop_body
                  %v184 = vld [vmem:[%s182] sm:%s175]
                  %185 = vst [vmem:[%s183] sm:%s175] %v184
                  %v186 = vld [vmem:[%s182 + $0x8] sm:%s175]
                  %187 = vst [vmem:[%s183 + $0x4] sm:%s175] %v186
                $region59: #{tpu_custom_call.1} parent=46 // loop_footer
                  %s181 = sadd.s32 1, %s177
                $region60: #{tpu_custom_call.1} parent=46 // loop_footer_branch
                  %176 = sbr.rel target = $region56
                $region61: #{tpu_custom_call.1} parent=46 // loop_exit
                  _
              $region47: #{tpu_custom_call.1} parent=31 // pred_fallthru
                _
            $region32: #{tpu_custom_call.1} parent=27 // pred_fallthru
              _
            // Predicated region
            $region33: #{tpu_custom_call.1} parent=27 // pred_check
              _
            $region34: #{tpu_custom_call.1} parent=27 // pred_check_branch
              %149 = sbr.rel (0) target = $region36
            $region35: #{tpu_custom_call.1} parent=27 // pred_region
              %s151 = ssub.s32 16, 1
              loop: start=0, step=1, limit=1
              $region37: #{tpu_custom_call.1} parent=35 // loop_pre_header
                _
              $region38: #{tpu_custom_call.1} parent=35 // loop_header
                %s153 = sphi 0, %s157
                %p154 = scmp.ge.s32.totalorder %s153, 1
                %s158 = sphi %s143, %s143
                %s159 = sphi %s136, %s136
              $region39: #{tpu_custom_call.1} parent=35 // loop_header_branch
                %156 = sbr.rel (%p154) target = $region43
              $region40: #{tpu_custom_call.1} parent=35 // loop_body
                %v160 = vld [vmem:[%s158] sm:%s151]
                %161 = vst [vmem:[%s159] sm:%s151] %v160
                %v162 = vld [vmem:[%s158 + $0x8] sm:%s151]
                %163 = vst [vmem:[%s159 + $0x4] sm:%s151] %v162
              $region41: #{tpu_custom_call.1} parent=35 // loop_footer
                %s157 = sadd.s32 1, %s153
              $region42: #{tpu_custom_call.1} parent=35 // loop_footer_branch
                %152 = sbr.rel target = $region38
              $region43: #{tpu_custom_call.1} parent=35 // loop_exit
                _
            $region36: #{tpu_custom_call.1} parent=27 // pred_fallthru
              _
          $region28: #{tpu_custom_call.1} parent=23 // pred_fallthru
            _
          %188 = vnop
        $region24: #{tpu_custom_call.1} parent=19 // pred_fallthru
          _
      $region20: #{tpu_custom_call.1} parent=5 // pred_fallthru
        _
      %p189 = scmp.le.s32.totalorder 1, %s8
      %p190 = scmp.lt.s32.totalorder %s8, 5
      %p191 = pnand %p189, %p190
      %p192 = pneg %p191
      // Predicated region
      $region62: #{tpu_custom_call.1} parent=5 // pred_check
        _
      $region63: #{tpu_custom_call.1} parent=5 // pred_check_branch
        %194 = sbr.rel (%p191) target = $region65
      $region64: #{tpu_custom_call.1} parent=5 // pred_region
        %s195 = ssub.s32 %s8, 1
        %s196 = sand.u32 %s46, 1
        %s197 = sand.u32 %s46, 1
        %s198 = smul.addr %s197, 8
        %s199 = scalar_lea.vmem [#allocation2], %s198
        // Predicated region
        $region66: #{tpu_custom_call.1} parent=64 // pred_check
          %p200 = pneg %p59
        $region67: #{tpu_custom_call.1} parent=64 // pred_check_branch
          %202 = sbr.rel (%p200) target = $region69
        $region68: #{tpu_custom_call.1} parent=64 // pred_region
          _
        $region69: #{tpu_custom_call.1} parent=64 // pred_fallthru
          _
        %s203 = sand.u32 %s46, 1
        %s204 = sand.u32 %s46, 1
        %s205 = smul.addr %s204, 8
        %s206 = scalar_lea.vmem [#allocation2], %s205
        %p207 = pneg %p59
        %p208 = pneg %p56
        %p209 = pneg %p80
        %p210 = pneg %p77
        %p211 = pneg %p108
        %p212 = pneg %p105
        %s213 = sadd.s32 %s18, %s19
        %p214 = scmp.lt.s32.totalorder %s213, 1
        %s215 = scalar_select %p214, %s213, 1
        %s216 = smul.addr %s215, 16
        %s217 = smul.addr %s216, 8
        %s218 = scalar_lea.vmem %s2, %s217
        %s219 = smul.u32 %s19, 2
        %s220 = sadd.s32 %s219, %s20
        %s221 = smul.u32 2, %s18
        %s222 = sadd.s32 %s18, %s19
        %p223 = scmp.lt.s32.totalorder %s222, 1
        %s224 = scalar_select %p223, %s222, 1
        %s225 = smul.addr %s224, 16
        %s226 = smul.addr %s225, 8
        %s227 = scalar_lea.vmem %s2, %s226
        %s228 = sadd.s32 %s18, %s19
        %p230 = scmp.eq.s32.totalorder %s20, 0
        // Predicated region
        $region70: #{tpu_custom_call.1} parent=64 // pred_check
          %p231 = pneg %p230
        $region71: #{tpu_custom_call.1} parent=64 // pred_check_branch
          %233 = sbr.rel (%p231) target = $region73
        $region72: #{tpu_custom_call.1} parent=64 // pred_region
          %vm234 = vcmask 7168
          %235 = vst.msk [vmem:[%s227] sm:$0xff] %vm234, 0.0
          %236 = vst.msk [vmem:[%s227 + $0x8] sm:$0xff] %vm234, 0.0
          %237 = vst.msk [vmem:[%s227 + $0x10] sm:$0xff] %vm234, 0.0
          %238 = vst.msk [vmem:[%s227 + $0x18] sm:$0xff] %vm234, 0.0
          %239 = vst.msk [vmem:[%s227 + $0x20] sm:$0xff] %vm234, 0.0
          %240 = vst.msk [vmem:[%s227 + $0x28] sm:$0xff] %vm234, 0.0
          %241 = vst.msk [vmem:[%s227 + $0x30] sm:$0xff] %vm234, 0.0
          %242 = vst.msk [vmem:[%s227 + $0x38] sm:$0xff] %vm234, 0.0
          %243 = vst.msk [vmem:[%s227 + $0x40] sm:$0xff] %vm234, 0.0
          %244 = vst.msk [vmem:[%s227 + $0x48] sm:$0xff] %vm234, 0.0
          %245 = vst.msk [vmem:[%s227 + $0x50] sm:$0xff] %vm234, 0.0
          %246 = vst.msk [vmem:[%s227 + $0x58] sm:$0xff] %vm234, 0.0
          %247 = vst.msk [vmem:[%s227 + $0x60] sm:$0xff] %vm234, 0.0
          %248 = vst.msk [vmem:[%s227 + $0x68] sm:$0xff] %vm234, 0.0
          %249 = vst.msk [vmem:[%s227 + $0x70] sm:$0xff] %vm234, 0.0
          %250 = vst.msk [vmem:[%s227 + $0x78] sm:$0xff] %vm234, 0.0
        $region73: #{tpu_custom_call.1} parent=64 // pred_fallthru
          _
        %v251 = vld [vmem:[%s1] sm:$0xf]
        %v252 = vld [vmem:[%s1 + $0x4] sm:$0xf]
        %v253 = vld [vmem:[%s1 + $0x8] sm:$0xf]
        %v254 = vld [vmem:[%s1 + $0xc] sm:$0xf]
        %v255 = vld [vmem:[%s1 + $0x10] sm:$0xf]
        %v256 = vld [vmem:[%s1 + $0x14] sm:$0xf]
        %v257 = vld [vmem:[%s1 + $0x18] sm:$0xf]
        %v258 = vld [vmem:[%s1 + $0x1c] sm:$0xf]
        %v259 = vld [vmem:[%s1 + $0x20] sm:$0xf]
        %v260 = vld [vmem:[%s1 + $0x24] sm:$0xf]
        %v261 = vld [vmem:[%s1 + $0x28] sm:$0xf]
        %v262 = vld [vmem:[%s1 + $0x2c] sm:$0xf]
        %v263 = vld [vmem:[%s1 + $0x30] sm:$0xf]
        %v264 = vld [vmem:[%s1 + $0x34] sm:$0xf]
        %v265 = vld [vmem:[%s1 + $0x38] sm:$0xf]
        %v266 = vld [vmem:[%s1 + $0x3c] sm:$0xf]
        %v267 = vld [vmem:[%s199] sm:$0xf]
        %v268 = vld [vmem:[%s199 + $0x4] sm:$0xf]
        %v285 = vunpack.c.l.b16 %v251
        %v286 = vunpack.c.l.b16 %v252
        %v287 = vunpack.c.l.b16 %v253
        %v288 = vunpack.c.l.b16 %v254
        %v289 = vunpack.c.l.b16 %v255
        %v290 = vunpack.c.l.b16 %v256
        %v291 = vunpack.c.l.b16 %v257
        %v292 = vunpack.c.l.b16 %v258
        %v293 = vunpack.c.l.b16 %v259
        %v294 = vunpack.c.l.b16 %v260
        %v295 = vunpack.c.l.b16 %v261
        %v296 = vunpack.c.l.b16 %v262
        %v297 = vunpack.c.l.b16 %v263
        %v298 = vunpack.c.l.b16 %v264
        %v299 = vunpack.c.l.b16 %v265
        %v300 = vunpack.c.l.b16 %v266
        %v301 = vpack.c.b16 %v286, %v285
        %v302 = vpack.c.b16 %v288, %v287
        %v303 = vpack.c.b16 %v290, %v289
        %v304 = vpack.c.b16 %v292, %v291
        %v305 = vpack.c.b16 %v294, %v293
        %v306 = vpack.c.b16 %v296, %v295
        %v307 = vpack.c.b16 %v298, %v297
        %v308 = vpack.c.b16 %v300, %v299
        %v311 = vunpack.c.l.b16 %v267
        %v312 = vunpack.c.l.b16 %v268
        %v313 = vpack.c.b16 %v312, %v311
        %vm315 = vcmask 130048
        %v317 = vsel %vm315, %v301, 0
        %v320 = vsel %vm315, %v302, 0
        %v323 = vsel %vm315, %v303, 0
        %v326 = vsel %vm315, %v304, 0
        %v329 = vsel %vm315, %v305, 0
        %v332 = vsel %vm315, %v306, 0
        %v335 = vsel %vm315, %v307, 0
        %v338 = vsel %vm315, %v308, 0
        %340 = vmatprep.subr.bf16.mxu0 0
        %341 = vmatpush1.bf16.msra.mxu0 0
        %342 = vmatprep.subr.bf16.mxu0 0
        %343 = vmatpush1.bf16.msra.mxu0 0
        %344 = vmatprep.subr.bf16.mxu0 0
        %345 = vmatpush1.bf16.msra.mxu0 0
        %346 = vmatprep.subr.bf16.mxu0 0
        %347 = vmatpush1.bf16.msra.mxu0 0
        %348 = vmatprep.subr.bf16.mxu0 0
        %349 = vmatpush1.bf16.msra.mxu0 0
        %350 = vmatprep.subr.bf16.mxu0 0
        %351 = vmatpush1.bf16.msra.mxu0 0
        %352 = vmatprep.subr.bf16.mxu0 0
        %353 = vmatpush1.bf16.msra.mxu0 0
        %354 = vmatprep.subr.bf16.mxu0 0
        %355 = vmatpush1.bf16.msra.mxu0 %v313
        %356 = vmatprep.subr.bf16.mxu0 0
        %357 = vmatpush2.bf16.msra.mxu0 0
        %358 = vmatprep.subr.bf16.mxu0 0
        %359 = vmatpush2.bf16.msra.mxu0 0
        %360 = vmatprep.subr.bf16.mxu0 0
        %361 = vmatpush2.bf16.msra.mxu0 0
        %362 = vmatprep.subr.bf16.mxu0 0
        %363 = vmatpush2.bf16.msra.mxu0 0
        %364 = vmatprep.subr.bf16.mxu0 0
        %365 = vmatpush2.bf16.msra.mxu0 0
        %366 = vmatprep.subr.bf16.mxu0 0
        %367 = vmatpush2.bf16.msra.mxu0 0
        %368 = vmatprep.subr.bf16.mxu0 0
        %369 = vmatpush2.bf16.msra.mxu0 0
        %370 = vmatprep.subr.bf16.mxu0 0
        %371 = vmatpush2.bf16.msra.mxu0 0
        %372 = vmatprep.mubr.bf16.mxu0 0
        %373 = vmatmul.mubr.bf16.gmra.mxu0 %v317
        %v374 = vpop.f32.mrf.mxu0
        %v375 = vadd.f32 0.0, %v374
        %v376 = vpop.f32.mrf.mxu0
        %v377 = vpop.f32.mrf.mxu0
        %v378 = vadd.f32 0.0, %v377
        %v379 = vpop.f32.mrf.mxu0
        %380 = vmatprep.mubr.bf16.mxu0 0
        %381 = vmatmul.mubr.bf16.gmra.mxu0 %v320
        %v382 = vpop.f32.mrf.mxu0
        %v383 = vadd.f32 0.0, %v382
        %v384 = vpop.f32.mrf.mxu0
        %v385 = vpop.f32.mrf.mxu0
        %v386 = vadd.f32 0.0, %v385
        %v387 = vpop.f32.mrf.mxu0
        %388 = vmatprep.mubr.bf16.mxu0 0
        %389 = vmatmul.mubr.bf16.gmra.mxu0 %v323
        %v390 = vpop.f32.mrf.mxu0
        %v391 = vadd.f32 0.0, %v390
        %v392 = vpop.f32.mrf.mxu0
        %v393 = vpop.f32.mrf.mxu0
        %v394 = vadd.f32 0.0, %v393
        %v395 = vpop.f32.mrf.mxu0
        %396 = vmatprep.mubr.bf16.mxu0 0
        %397 = vmatmul.mubr.bf16.gmra.mxu0 %v326
        %v398 = vpop.f32.mrf.mxu0
        %v399 = vadd.f32 0.0, %v398
        %v400 = vpop.f32.mrf.mxu0
        %v401 = vpop.f32.mrf.mxu0
        %v402 = vadd.f32 0.0, %v401
        %v403 = vpop.f32.mrf.mxu0
        %404 = vmatprep.mubr.bf16.mxu0 0
        %405 = vmatmul.mubr.bf16.gmra.mxu0 %v329
        %v406 = vpop.f32.mrf.mxu0
        %v407 = vadd.f32 0.0, %v406
        %v408 = vpop.f32.mrf.mxu0
        %v409 = vpop.f32.mrf.mxu0
        %v410 = vadd.f32 0.0, %v409
        %v411 = vpop.f32.mrf.mxu0
        %412 = vmatprep.mubr.bf16.mxu0 0
        %413 = vmatmul.mubr.bf16.gmra.mxu0 %v332
        %v414 = vpop.f32.mrf.mxu0
        %v415 = vadd.f32 0.0, %v414
        %v416 = vpop.f32.mrf.mxu0
        %v417 = vpop.f32.mrf.mxu0
        %v418 = vadd.f32 0.0, %v417
        %v419 = vpop.f32.mrf.mxu0
        %420 = vmatprep.mubr.bf16.mxu0 0
        %421 = vmatmul.mubr.bf16.gmra.mxu0 %v335
        %v422 = vpop.f32.mrf.mxu0
        %v423 = vadd.f32 0.0, %v422
        %v424 = vpop.f32.mrf.mxu0
        %v425 = vpop.f32.mrf.mxu0
        %v426 = vadd.f32 0.0, %v425
        %v427 = vpop.f32.mrf.mxu0
        %428 = vmatprep.mubr.bf16.mxu0 0
        %429 = vmatmul.mubr.bf16.gmra.mxu0 %v338
        %v430 = vpop.f32.mrf.mxu0
        %v431 = vadd.f32 0.0, %v430
        %v432 = vpop.f32.mrf.mxu0
        %v433 = vpop.f32.mrf.mxu0
        %v434 = vadd.f32 0.0, %v433
        %v435 = vpop.f32.mrf.mxu0
        %436 = vdwg.mxu0
        %v437 = vmax.f32 %v375, 0.0
        %v438 = vmax.f32 %v378, 0.0
        %v439 = vmax.f32 %v383, 0.0
        %v440 = vmax.f32 %v386, 0.0
        %v441 = vmax.f32 %v391, 0.0
        %v442 = vmax.f32 %v394, 0.0
        %v443 = vmax.f32 %v399, 0.0
        %v444 = vmax.f32 %v402, 0.0
        %v445 = vmax.f32 %v407, 0.0
        %v446 = vmax.f32 %v410, 0.0
        %v447 = vmax.f32 %v415, 0.0
        %v448 = vmax.f32 %v418, 0.0
        %v449 = vmax.f32 %v423, 0.0
        %v450 = vmax.f32 %v426, 0.0
        %v451 = vmax.f32 %v431, 0.0
        %v452 = vmax.f32 %v434, 0.0
        %453 = vadd.xlane.f32.xlu0 %v437
        %v454 = vpop.xlane.xlu0 %453
        %455 = vadd.xlane.f32.xlu0 %v438
        %v456 = vpop.xlane.xlu0 %455
        %457 = vadd.xlane.f32.xlu0 %v439
        %v458 = vpop.xlane.xlu0 %457
        %459 = vadd.xlane.f32.xlu0 %v440
        %v460 = vpop.xlane.xlu0 %459
        %461 = vadd.xlane.f32.xlu0 %v441
        %v462 = vpop.xlane.xlu0 %461
        %463 = vadd.xlane.f32.xlu0 %v442
        %v464 = vpop.xlane.xlu0 %463
        %465 = vadd.xlane.f32.xlu0 %v443
        %v466 = vpop.xlane.xlu0 %465
        %467 = vadd.xlane.f32.xlu0 %v444
        %v468 = vpop.xlane.xlu0 %467
        %469 = vadd.xlane.f32.xlu0 %v445
        %v470 = vpop.xlane.xlu0 %469
        %471 = vadd.xlane.f32.xlu0 %v446
        %v472 = vpop.xlane.xlu0 %471
        %473 = vadd.xlane.f32.xlu0 %v447
        %v474 = vpop.xlane.xlu0 %473
        %475 = vadd.xlane.f32.xlu0 %v448
        %v476 = vpop.xlane.xlu0 %475
        %477 = vadd.xlane.f32.xlu0 %v449
        %v478 = vpop.xlane.xlu0 %477
        %479 = vadd.xlane.f32.xlu0 %v450
        %v480 = vpop.xlane.xlu0 %479
        %481 = vadd.xlane.f32.xlu0 %v451
        %v482 = vpop.xlane.xlu0 %481
        %483 = vadd.xlane.f32.xlu0 %v452
        %v484 = vpop.xlane.xlu0 %483
        %v485 = vadd.f32 %v454, 0.0
        %v486 = vadd.f32 %v456, 0.0
        %v487 = vadd.f32 %v458, 0.0
        %v488 = vadd.f32 %v460, 0.0
        %v489 = vadd.f32 %v462, 0.0
        %v490 = vadd.f32 %v464, 0.0
        %v491 = vadd.f32 %v466, 0.0
        %v492 = vadd.f32 %v468, 0.0
        %v493 = vadd.f32 %v470, 0.0
        %v494 = vadd.f32 %v472, 0.0
        %v495 = vadd.f32 %v474, 0.0
        %v496 = vadd.f32 %v476, 0.0
        %v497 = vadd.f32 %v478, 0.0
        %v498 = vadd.f32 %v480, 0.0
        %v499 = vadd.f32 %v482, 0.0
        %v500 = vadd.f32 %v484, 0.0
        %v501 = vld [vmem:[%s227] sm:$0xff]
        %v502 = vld [vmem:[%s227 + $0x8] sm:$0xff]
        %v503 = vld [vmem:[%s227 + $0x10] sm:$0xff]
        %v504 = vld [vmem:[%s227 + $0x18] sm:$0xff]
        %v505 = vld [vmem:[%s227 + $0x20] sm:$0xff]
        %v506 = vld [vmem:[%s227 + $0x28] sm:$0xff]
        %v507 = vld [vmem:[%s227 + $0x30] sm:$0xff]
        %v508 = vld [vmem:[%s227 + $0x38] sm:$0xff]
        %v509 = vld [vmem:[%s227 + $0x40] sm:$0xff]
        %v510 = vld [vmem:[%s227 + $0x48] sm:$0xff]
        %v511 = vld [vmem:[%s227 + $0x50] sm:$0xff]
        %v512 = vld [vmem:[%s227 + $0x58] sm:$0xff]
        %v513 = vld [vmem:[%s227 + $0x60] sm:$0xff]
        %v514 = vld [vmem:[%s227 + $0x68] sm:$0xff]
        %v515 = vld [vmem:[%s227 + $0x70] sm:$0xff]
        %v516 = vld [vmem:[%s227 + $0x78] sm:$0xff]
        %v517 = vadd.f32 %v501, %v485
        %v518 = vadd.f32 %v502, %v486
        %v519 = vadd.f32 %v503, %v487
        %v520 = vadd.f32 %v504, %v488
        %v521 = vadd.f32 %v505, %v489
        %v522 = vadd.f32 %v506, %v490
        %v523 = vadd.f32 %v507, %v491
        %v524 = vadd.f32 %v508, %v492
        %v525 = vadd.f32 %v509, %v493
        %v526 = vadd.f32 %v510, %v494
        %v527 = vadd.f32 %v511, %v495
        %v528 = vadd.f32 %v512, %v496
        %v529 = vadd.f32 %v513, %v497
        %v530 = vadd.f32 %v514, %v498
        %v531 = vadd.f32 %v515, %v499
        %v532 = vadd.f32 %v516, %v500
        %vm533 = vcmask 7168
        %534 = vst.msk [vmem:[%s227] sm:$0xff] %vm533, %v517
        %535 = vst.msk [vmem:[%s227 + $0x8] sm:$0xff] %vm533, %v518
        %536 = vst.msk [vmem:[%s227 + $0x10] sm:$0xff] %vm533, %v519
        %537 = vst.msk [vmem:[%s227 + $0x18] sm:$0xff] %vm533, %v520
        %538 = vst.msk [vmem:[%s227 + $0x20] sm:$0xff] %vm533, %v521
        %539 = vst.msk [vmem:[%s227 + $0x28] sm:$0xff] %vm533, %v522
        %540 = vst.msk [vmem:[%s227 + $0x30] sm:$0xff] %vm533, %v523
        %541 = vst.msk [vmem:[%s227 + $0x38] sm:$0xff] %vm533, %v524
        %542 = vst.msk [vmem:[%s227 + $0x40] sm:$0xff] %vm533, %v525
        %543 = vst.msk [vmem:[%s227 + $0x48] sm:$0xff] %vm533, %v526
        %544 = vst.msk [vmem:[%s227 + $0x50] sm:$0xff] %vm533, %v527
        %545 = vst.msk [vmem:[%s227 + $0x58] sm:$0xff] %vm533, %v528
        %546 = vst.msk [vmem:[%s227 + $0x60] sm:$0xff] %vm533, %v529
        %547 = vst.msk [vmem:[%s227 + $0x68] sm:$0xff] %vm533, %v530
        %548 = vst.msk [vmem:[%s227 + $0x70] sm:$0xff] %vm533, %v531
        %549 = vst.msk [vmem:[%s227 + $0x78] sm:$0xff] %vm533, %v532
        %s550 = sadd.s32 %s18, %s19
        %p551 = scmp.lt.s32.totalorder %s550, 1
        %s552 = scalar_select %p551, %s550, 1
        %s553 = smul.addr %s552, 16
        %s554 = smul.addr %s553, 8
        %s555 = scalar_lea.vmem %s2, %s554
        // Predicated region
        $region74: #{tpu_custom_call.1} parent=64 // pred_check
          %p556 = pneg %p105
        $region75: #{tpu_custom_call.1} parent=64 // pred_check_branch
          %558 = sbr.rel (%p556) target = $region77
        $region76: #{tpu_custom_call.1} parent=64 // pred_region
          %s559 = sadd.s32 %s18, %s19
        $region77: #{tpu_custom_call.1} parent=64 // pred_fallthru
          _
      $region65: #{tpu_custom_call.1} parent=5 // pred_fallthru
        _
      %p560 = scmp.le.s32.totalorder 2, %s8
      // Predicated region
      $region78: #{tpu_custom_call.1} parent=5 // pred_check
        %p561 = pneg %p560
      $region79: #{tpu_custom_call.1} parent=5 // pred_check_branch
        %563 = sbr.rel (%p561) target = $region81
      $region80: #{tpu_custom_call.1} parent=5 // pred_region
        %s564 = ssub.s32 %s8, 2
        // Predicated region
        $region82: #{tpu_custom_call.1} parent=80 // pred_check
          %p565 = pneg %p111
        $region83: #{tpu_custom_call.1} parent=80 // pred_check_branch
          %567 = sbr.rel (%p565) target = $region85
        $region84: #{tpu_custom_call.1} parent=80 // pred_region
          %s568 = sadd.s32 %s21, %s22
          %p569 = scmp.lt.s32.totalorder %s568, 1
          %s570 = scalar_select %p569, %s568, 1
          %s571 = smul.addr %s570, 16
          %s572 = smul.addr %s571, 8
          %s573 = scalar_lea.vmem %s2, %s572
        $region85: #{tpu_custom_call.1} parent=80 // pred_fallthru
          _
      $region81: #{tpu_custom_call.1} parent=5 // pred_fallthru
        _
    $region6: #{tpu_custom_call.1} parent=1 // loop_footer
      %s12 = sadd.s32 1, %s8
    $region7: #{tpu_custom_call.1} parent=1 // loop_footer_branch
      %7 = sbr.rel target = $region3
    $region8: #{tpu_custom_call.1} parent=1 // loop_exit
      _

</llo_original>
